<compile_context>
chip_gen: v7x
topology: tpu7x:2x2x1
jax: 0.10.0
libtpu: 0.0.40
codegen_flags: <defaults>
</compile_context>

<pallas_src>
import functools

import jax
import jax.numpy as jnp
from jax.experimental import pallas as pl
from jax.experimental.pallas import tpu as pltpu


def _round_up(x: int, m: int) -> int:
    return (x + m - 1) // m * m


def _mlp_kernel(x_ref, w1_ref, b1_ref, w2_ref, b2_ref, w3_ref, b3_ref,
                o_ref, acc_ref):
    """Fused 3-layer MLP. Grid axis 0 tiles the layer-1 reduction (d_in)."""
    k = pl.program_id(0)

    # Zero the layer-1 accumulator at the start of the K loop.
    @pl.when(k == 0)
    def _():
        acc_ref[...] = jnp.zeros_like(acc_ref)

    # Layer 1 partial product: bf16 operands, f32 accumulation on the MXU.
    acc_ref[...] += jnp.dot(x_ref[...], w1_ref[...],
                            preferred_element_type=jnp.float32)

    # On the last K tile, finish layer 1 and run layers 2 & 3 (all VMEM-resident).
    @pl.when(k == pl.num_programs(0) - 1)
    def _():
        h1 = jnp.maximum(acc_ref[...] + b1_ref[...], 0.0)
        h1 = h1.astype(w2_ref.dtype)                           # bf16 for MXU

        h2 = jnp.dot(h1, w2_ref[...], preferred_element_type=jnp.float32)
        h2 = jnp.maximum(h2 + b2_ref[...], 0.0)
        h2 = h2.astype(w3_ref.dtype)                           # bf16 for MXU

        logits = jnp.dot(h2, w3_ref[...], preferred_element_type=jnp.float32)
        o_ref[...] = (logits + b3_ref[...]).astype(o_ref.dtype)


@functools.partial(jax.jit, static_argnames=("tk",))
def mlp_forward(x_nchw, w1, b1, w2, b2, w3, b3, *, tk=512):
    """x_nchw: (B, C, H, W) float32 -> logits (B, n_out) float32.

    Weights are (in_features, out_features); biases are (out_features,).
    `tk` is the layer-1 K-tile size (multiple of 128). For the real module
    (d_in=187500, hid=512) use tk ~ 2048-4096 so double-buffered W1 tiles fit
    comfortably in VMEM on every TPU generation (incl. v7x's 64 MiB).
    """
    B = x_nchw.shape[0]
    x2d = x_nchw.reshape(B, -1)
    d_in = x2d.shape[1]
    hid = w1.shape[1]
    n_out = w3.shape[1]

    # Padded, hardware-friendly shapes.
    b_pad = _round_up(max(B, 8), 8)            # sublane granularity
    d_in_pad = _round_up(d_in, tk)             # whole number of K tiles
    n_out_pad = _round_up(max(n_out, 128), 128)  # lane-dense output

    # bf16 matmul operands (zero padding keeps the math exact); f32 biases.
    x_p = jnp.zeros((b_pad, d_in_pad), jnp.bfloat16)
    x_p = x_p.at[:B, :d_in].set(x2d.astype(jnp.bfloat16))
    w1_p = jnp.zeros((d_in_pad, hid), jnp.bfloat16)
    w1_p = w1_p.at[:d_in, :].set(w1.astype(jnp.bfloat16))
    w2_b = w2.astype(jnp.bfloat16)
    w3_p = jnp.zeros((hid, n_out_pad), jnp.bfloat16)
    w3_p = w3_p.at[:, :n_out].set(w3.astype(jnp.bfloat16))

    b1r = b1.reshape(1, hid).astype(jnp.float32)
    b2r = b2.reshape(1, hid).astype(jnp.float32)
    b3r = jnp.zeros((1, n_out_pad), jnp.float32)
    b3r = b3r.at[:, :n_out].set(b3.reshape(1, n_out).astype(jnp.float32))

    k_tiles = d_in_pad // tk

    out = pl.pallas_call(
        _mlp_kernel,
        out_shape=jax.ShapeDtypeStruct((b_pad, n_out_pad), jnp.float32),
        grid=(k_tiles,),
        in_specs=[
            pl.BlockSpec((b_pad, tk), lambda k: (0, k)),       # x      : K-tiled
            pl.BlockSpec((tk, hid), lambda k: (k, 0)),         # W1     : K-tiled
            pl.BlockSpec((1, hid), lambda k: (0, 0)),          # b1     : resident
            pl.BlockSpec((hid, hid), lambda k: (0, 0)),        # W2     : resident
            pl.BlockSpec((1, hid), lambda k: (0, 0)),          # b2     : resident
            pl.BlockSpec((hid, n_out_pad), lambda k: (0, 0)),  # W3     : resident
            pl.BlockSpec((1, n_out_pad), lambda k: (0, 0)),    # b3     : resident
        ],
        out_specs=pl.BlockSpec((b_pad, n_out_pad), lambda k: (0, 0)),
        scratch_shapes=[pltpu.VMEM((b_pad, hid), jnp.float32)],  # layer-1 f32 acc
        compiler_params=pltpu.CompilerParams(
            dimension_semantics=("arbitrary",),   # K is a reduction axis
        ),
        # TODO(synk): for large batches on v7x, add a leading "parallel" grid axis
        # over batch-row tiles so both TensorCores split the work.
    )(x_p, w1_p, b1r, w2_b, b2r, w3_p, b3r)

    return out[:B, :n_out]


def _init_linear(key, fan_in, fan_out):
    """PyTorch nn.Linear default init: U(-1/sqrt(fan_in), 1/sqrt(fan_in))."""
    kw, kb = jax.random.split(key)
    bound = 1.0 / jnp.sqrt(jnp.float32(fan_in))
    w = jax.random.uniform(kw, (fan_in, fan_out), jnp.float32, -bound, bound)
    b = jax.random.uniform(kb, (fan_out,), jnp.float32, -bound, bound)
    return w, b


if __name__ == "__main__":
    # Small shapes consistent with the module's structure
    # (d_in = C*H*W stands in for 3*250*250, hid=128 stands in for 512).
    B, C, H, W = 2, 3, 8, 8
    D_IN = C * H * W          # 192
    HID = 128
    N_OUT = 10

    key = jax.random.PRNGKey(0)
    kx, k1, k2, k3 = jax.random.split(key, 4)

    x = jax.random.normal(kx, (B, C, H, W), jnp.float32)
    w1, b1 = _init_linear(k1, D_IN, HID)
    w2, b2 = _init_linear(k2, HID, HID)
    w3, b3 = _init_linear(k3, HID, N_OUT)

    # tk=128 -> d_in padded to 256 -> 2 K tiles (exercises the accumulator path).
    logits = mlp_forward(x, w1, b1, w2, b2, w3, b3, tk=128)
    logits = jax.block_until_ready(logits)
    assert logits.shape == (B, N_OUT)

    # Pure-JAX reference with matching bf16 operand rounding / f32 accumulation.
    def bf(v):
        return v.astype(jnp.bfloat16).astype(jnp.float32)

    x2d = bf(x.reshape(B, -1))
    h1 = jnp.maximum(x2d @ bf(w1) + b1, 0.0)
    h2 = jnp.maximum(bf(h1) @ bf(w2) + b2, 0.0)
    ref = bf(h2) @ bf(w3) + b3

    assert jnp.allclose(logits, ref, atol=2e-2, rtol=2e-2), "mismatch vs reference"

    print("KERNEL_OK")
</pallas_src>

<mosaic_0001>
module attributes {stable_mosaic.version = 11 : i64} {
  func.func @_mlp_kernel(%arg0: i32, %arg1: memref<8x128xbf16, #tpu.memory_space<vmem>>, %arg2: memref<128x128xbf16, #tpu.memory_space<vmem>>, %arg3: memref<1x128xf32, #tpu.memory_space<vmem>>, %arg4: memref<128x128xbf16, #tpu.memory_space<vmem>>, %arg5: memref<1x128xf32, #tpu.memory_space<vmem>>, %arg6: memref<128x128xbf16, #tpu.memory_space<vmem>>, %arg7: memref<1x128xf32, #tpu.memory_space<vmem>>, %arg8: memref<8x128xf32, #tpu.memory_space<vmem>>, %arg9: memref<8x128xf32, #tpu.memory_space<vmem>>) attributes {dimension_semantics = [#tpu.dimension_semantics<arbitrary>], iteration_bounds = array<i64: 2>, scalar_prefetch = 0 : i64, scratch_operands = 1 : i64, tpu.core_type = #tpu.core_type<tc>, window_params = [{transform_indices = @transform_0, window_bounds = array<i64: 8, 128>}, {transform_indices = @transform_1, window_bounds = array<i64: 128, 128>}, {pipeline_mode = #tpu.pipeline_mode<synchronous>, transform_indices = @transform_2, window_bounds = array<i64: 1, 128>}, {pipeline_mode = #tpu.pipeline_mode<synchronous>, transform_indices = @transform_3, window_bounds = array<i64: 128, 128>}, {pipeline_mode = #tpu.pipeline_mode<synchronous>, transform_indices = @transform_4, window_bounds = array<i64: 1, 128>}, {pipeline_mode = #tpu.pipeline_mode<synchronous>, transform_indices = @transform_5, window_bounds = array<i64: 128, 128>}, {pipeline_mode = #tpu.pipeline_mode<synchronous>, transform_indices = @transform_6, window_bounds = array<i64: 1, 128>}, {pipeline_mode = #tpu.pipeline_mode<synchronous>, transform_indices = @transform_7, window_bounds = array<i64: 8, 128>}]} {
    %c0_i32 = arith.constant 0 : i32
    %0 = arith.cmpi eq, %arg0, %c0_i32 : i32
    %1 = arith.extui %0 : i1 to i32
    %c0_i32_0 = arith.constant 0 : i32
    %2 = arith.cmpi ne, %1, %c0_i32_0 : i32
    scf.if %2 {
      %cst_9 = arith.constant 0.000000e+00 : f32
      %12 = vector.broadcast %cst_9 : f32 to vector<8x128xf32>
      %c0_10 = arith.constant 0 : index
      %c0_11 = arith.constant 0 : index
      %13 = vector.load %arg9[%c0_10, %c0_11] : memref<8x128xf32, #tpu.memory_space<vmem>>, vector<8x128xf32>
      tpu.vector_store %arg9[%c0_10, %c0_11], %12 {strides = array<i32>} : memref<8x128xf32, #tpu.memory_space<vmem>>, vector<8x128xf32>,
    } else {
    }
    %c0 = arith.constant 0 : index
    %c0_1 = arith.constant 0 : index
    %3 = vector.load %arg9[%c0, %c0_1] : memref<8x128xf32, #tpu.memory_space<vmem>>, vector<8x128xf32>
    %c0_2 = arith.constant 0 : index
    %c0_3 = arith.constant 0 : index
    %4 = vector.load %arg1[%c0_2, %c0_3] : memref<8x128xbf16, #tpu.memory_space<vmem>>, vector<8x128xbf16>
    %c0_4 = arith.constant 0 : index
    %c0_5 = arith.constant 0 : index
    %5 = vector.load %arg2[%c0_4, %c0_5] : memref<128x128xbf16, #tpu.memory_space<vmem>>, vector<128x128xbf16>
    %cst = arith.constant dense<0.000000e+00> : vector<8x128xf32>
    %6 = tpu.matmul %4, %5, %cst {dimension_numbers = #tpu.dot_dimension_numbers<[1], [0], [0], [1], [0, 0, 1, 1], [], []>} : vector<8x128xbf16>, vector<128x128xbf16>, vector<8x128xf32> -> vector<8x128xf32>
    %7 = arith.addf %3, %6 : vector<8x128xf32>
    %c0_6 = arith.constant 0 : index
    %c0_7 = arith.constant 0 : index
    %8 = vector.load %arg9[%c0_6, %c0_7] : memref<8x128xf32, #tpu.memory_space<vmem>>, vector<8x128xf32>
    tpu.vector_store %arg9[%c0_6, %c0_7], %7 {strides = array<i32>} : memref<8x128xf32, #tpu.memory_space<vmem>>, vector<8x128xf32>,
    %c1_i32 = arith.constant 1 : i32
    %9 = arith.cmpi eq, %arg0, %c1_i32 : i32
    %10 = arith.extui %9 : i1 to i32
    %c0_i32_8 = arith.constant 0 : i32
    %11 = arith.cmpi ne, %10, %c0_i32_8 : i32
    scf.if %11 {
      %c0_9 = arith.constant 0 : index
      %c0_10 = arith.constant 0 : index
      %12 = vector.load %arg9[%c0_9, %c0_10] : memref<8x128xf32, #tpu.memory_space<vmem>>, vector<8x128xf32>
      %c0_11 = arith.constant 0 : index
      %c0_12 = arith.constant 0 : index
      %13 = vector.load %arg3[%c0_11, %c0_12] : memref<1x128xf32, #tpu.memory_space<vmem>>, vector<1x128xf32>
      %14 = vector.broadcast %13 : vector<1x128xf32> to vector<8x128xf32>
      %15 = arith.addf %12, %14 : vector<8x128xf32>
      %cst_13 = arith.constant 0.000000e+00 : f32
      %16 = vector.broadcast %cst_13 : f32 to vector<8x128xf32>
      %17 = arith.maximumf %15, %16 : vector<8x128xf32>
      %18 = arith.truncf %17 : vector<8x128xf32> to vector<8x128xbf16>
      %c0_14 = arith.constant 0 : index
      %c0_15 = arith.constant 0 : index
      %19 = vector.load %arg4[%c0_14, %c0_15] : memref<128x128xbf16, #tpu.memory_space<vmem>>, vector<128x128xbf16>
      %cst_16 = arith.constant dense<0.000000e+00> : vector<8x128xf32>
      %20 = tpu.matmul %18, %19, %cst_16 {dimension_numbers = #tpu.dot_dimension_numbers<[1], [0], [0], [1], [0, 0, 1, 1], [], []>} : vector<8x128xbf16>, vector<128x128xbf16>, vector<8x128xf32> -> vector<8x128xf32>
      %c0_17 = arith.constant 0 : index
      %c0_18 = arith.constant 0 : index
      %21 = vector.load %arg5[%c0_17, %c0_18] : memref<1x128xf32, #tpu.memory_space<vmem>>, vector<1x128xf32>
      %22 = vector.broadcast %21 : vector<1x128xf32> to vector<8x128xf32>
      %23 = arith.addf %20, %22 : vector<8x128xf32>
      %cst_19 = arith.constant 0.000000e+00 : f32
      %24 = vector.broadcast %cst_19 : f32 to vector<8x128xf32>
      %25 = arith.maximumf %23, %24 : vector<8x128xf32>
      %26 = arith.truncf %25 : vector<8x128xf32> to vector<8x128xbf16>
      %c0_20 = arith.constant 0 : index
      %c0_21 = arith.constant 0 : index
      %27 = vector.load %arg6[%c0_20, %c0_21] : memref<128x128xbf16, #tpu.memory_space<vmem>>, vector<128x128xbf16>
      %cst_22 = arith.constant dense<0.000000e+00> : vector<8x128xf32>
      %28 = tpu.matmul %26, %27, %cst_22 {dimension_numbers = #tpu.dot_dimension_numbers<[1], [0], [0], [1], [0, 0, 1, 1], [], []>} : vector<8x128xbf16>, vector<128x128xbf16>, vector<8x128xf32> -> vector<8x128xf32>
      %c0_23 = arith.constant 0 : index
      %c0_24 = arith.constant 0 : index
      %29 = vector.load %arg7[%c0_23, %c0_24] : memref<1x128xf32, #tpu.memory_space<vmem>>, vector<1x128xf32>
      %30 = vector.broadcast %29 : vector<1x128xf32> to vector<8x128xf32>
      %31 = arith.addf %28, %30 : vector<8x128xf32>
      %c0_25 = arith.constant 0 : index
      %c0_26 = arith.constant 0 : index
      %32 = vector.load %arg8[%c0_25, %c0_26] : memref<8x128xf32, #tpu.memory_space<vmem>>, vector<8x128xf32>
      tpu.vector_store %arg8[%c0_25, %c0_26], %31 {strides = array<i32>} : memref<8x128xf32, #tpu.memory_space<vmem>>, vector<8x128xf32>,
    } else {
    }
    return
  }
  func.func @transform_0(%arg0: i32) -> (i32, i32) {
    %c0_i32 = arith.constant 0 : i32
    %c0_i32_0 = arith.constant 0 : i32
    return %c0_i32, %arg0 : i32, i32
  }
  func.func @transform_1(%arg0: i32) -> (i32, i32) {
    %c0_i32 = arith.constant 0 : i32
    %c0_i32_0 = arith.constant 0 : i32
    return %arg0, %c0_i32 : i32, i32
  }
  func.func @transform_2(%arg0: i32) -> (i32, i32) {
    %c0_i32 = arith.constant 0 : i32
    %c0_i32_0 = arith.constant 0 : i32
    %c0_i32_1 = arith.constant 0 : i32
    return %c0_i32, %c0_i32_0 : i32, i32
  }
  func.func @transform_3(%arg0: i32) -> (i32, i32) {
    %c0_i32 = arith.constant 0 : i32
    %c0_i32_0 = arith.constant 0 : i32
    %c0_i32_1 = arith.constant 0 : i32
    return %c0_i32, %c0_i32_0 : i32, i32
  }
  func.func @transform_4(%arg0: i32) -> (i32, i32) {
    %c0_i32 = arith.constant 0 : i32
    %c0_i32_0 = arith.constant 0 : i32
    %c0_i32_1 = arith.constant 0 : i32
    return %c0_i32, %c0_i32_0 : i32, i32
  }
  func.func @transform_5(%arg0: i32) -> (i32, i32) {
    %c0_i32 = arith.constant 0 : i32
    %c0_i32_0 = arith.constant 0 : i32
    %c0_i32_1 = arith.constant 0 : i32
    return %c0_i32, %c0_i32_0 : i32, i32
  }
  func.func @transform_6(%arg0: i32) -> (i32, i32) {
    %c0_i32 = arith.constant 0 : i32
    %c0_i32_0 = arith.constant 0 : i32
    %c0_i32_1 = arith.constant 0 : i32
    return %c0_i32, %c0_i32_0 : i32, i32
  }
  func.func @transform_7(%arg0: i32) -> (i32, i32) {
    %c0_i32 = arith.constant 0 : i32
    %c0_i32_0 = arith.constant 0 : i32
    %c0_i32_1 = arith.constant 0 : i32
    return %c0_i32, %c0_i32_0 : i32, i32
  }
}

</mosaic_0001>

<llo_original>
// kernel: mlp_forward.1
$region0: #{mlp_forward.1}
  #allocation0 [shape = 'u32[]', space=smem, size = 0x4, offset = 0x4, fixed_abs, tag = 'smem constant byte address 0x4 - core index']
  #allocation1 [shape = 'u32[144,128]{1,0:T(1,128)}', space=vmem, size = 0x12000, scoped, tag = 'internal scratch']
  #allocation2 [shape = 'f32[8,128]{1,0:T(8,128)}', space=vmem, size = 0x1000, scoped, tag = 'scratch operand']
  %s0 = inlined_call_operand.vmem [shape: bf16[8,256], index: 0, kind: input, shape index: {}]
  %s1 = inlined_call_operand.vmem [shape: bf16[256,128], index: 1, kind: input, shape index: {}]
  %s2 = inlined_call_operand.vmem [shape: f32[1,128], index: 2, kind: input, shape index: {}]
  %s3 = inlined_call_operand.vmem [shape: bf16[128,128], index: 3, kind: input, shape index: {}]
  %s4 = inlined_call_operand.vmem [shape: f32[1,128], index: 4, kind: input, shape index: {}]
  %s5 = inlined_call_operand.vmem [shape: bf16[128,128], index: 5, kind: input, shape index: {}]
  %s6 = inlined_call_operand.vmem [shape: f32[1,128], index: 6, kind: input, shape index: {}]
  %s7 = inlined_call_operand.vmem [shape: f32[8,128], index: 7, kind: output, shape index: {}]
  %s8 = sld [smem:[#allocation0]]
  $region69: #{mlp_forward.1} parent=0
    _
  %s10 = ssub.s32 1, %s8
  %s11 = scalar_select 0, %s10, %s8
  loop: start=0, step=1, limit=4
  $region2: #{mlp_forward.1} parent=0 // loop_pre_header
    _
  $region3: #{mlp_forward.1} parent=0 // loop_header
    %s13 = sphi 0, %s17
    %p14 = scmp.ge.s32.totalorder %s13, 4
    %s23 = sphi 0, %s25
    %s26 = sphi 0, %s23
    %s27 = sphi 0, %s26
    %s43 = sphi 0, %s27
    %s49 = sphi 0, %s51
    %s52 = sphi 0, %s49
    %s53 = sphi 0, %s52
    %s69 = sphi 0, %s53
    %s73 = sphi 0, %s73
    %s75 = sphi 0, %s73
    %s76 = sphi 0, %s75
    %s90 = sphi 0, %s76
    %s94 = sphi 0, %s94
    %s96 = sphi 0, %s94
    %s97 = sphi 0, %s96
    %s111 = sphi 0, %s97
    %s115 = sphi 0, %s115
    %s117 = sphi 0, %s115
    %s118 = sphi 0, %s117
    %s132 = sphi 0, %s118
    %s136 = sphi 0, %s136
    %s138 = sphi 0, %s136
    %s139 = sphi 0, %s138
    %s153 = sphi 0, %s139
    %s157 = sphi 0, %s157
    %s159 = sphi 0, %s157
    %s160 = sphi 0, %s159
    %s174 = sphi 0, %s160
    %s178 = sphi 0, %s178
    %s180 = sphi 0, %s178
    %s181 = sphi 0, %s180
    %s195 = sphi 0, %s181
  $region4: #{mlp_forward.1} parent=0 // loop_header_branch
    %16 = sbr.rel (%p14) target = $region8
  $region5: #{mlp_forward.1} parent=0 // loop_body
    %s18 = ssub.s32 %s13, 1
    %s19 = ssub.s32 %s13, 2
    %s20 = sadd.s32 %s13, 1
    %s21 = ssub.s32 %s13, %s20
    %p22 = scmp.eq.s32.totalorder %s21, 0
    %s24 = sadd.s32 %s23, 1
    %s25 = scalar_select %p22, %s23, %s24
    %p28 = pneg %p22
    %p29 = scmp.eq.s32.totalorder %s13, 1
    %p30 = por %p28, %p29
    %p31 = scmp.ne.s32.totalorder %s23, %s26
    %p32 = scmp.eq.s32.totalorder %s13, 0
    %p33 = por %p31, %p32
    %p34 = scmp.ne.s32.totalorder %s23, %s26
    %p35 = scmp.eq.s32.totalorder %s18, 1
    %p36 = por %p34, %p35
    %p37 = scmp.ne.s32.totalorder %s26, %s27
    %p38 = scmp.eq.s32.totalorder %s18, 0
    %p39 = por %p37, %p38
    %p40 = scmp.ne.s32.totalorder %s26, %s27
    %p41 = scmp.eq.s32.totalorder %s19, 1
    %p42 = por %p40, %p41
    %p44 = scmp.ne.s32.totalorder %s27, %s43
    %p45 = scmp.eq.s32.totalorder %s19, 0
    %p46 = por %p44, %p45
    %s47 = ssub.s32 %s13, %s20
    %p48 = scmp.eq.s32.totalorder %s47, 0
    %s50 = sadd.s32 %s49, 1
    %s51 = scalar_select %p48, %s49, %s50
    %p54 = pneg %p48
    %p55 = scmp.eq.s32.totalorder %s13, 1
    %p56 = por %p54, %p55
    %p57 = scmp.ne.s32.totalorder %s49, %s52
    %p58 = scmp.eq.s32.totalorder %s13, 0
    %p59 = por %p57, %p58
    %p60 = scmp.ne.s32.totalorder %s49, %s52
    %p61 = scmp.eq.s32.totalorder %s18, 1
    %p62 = por %p60, %p61
    %p63 = scmp.ne.s32.totalorder %s52, %s53
    %p64 = scmp.eq.s32.totalorder %s18, 0
    %p65 = por %p63, %p64
    %p66 = scmp.ne.s32.totalorder %s52, %s53
    %p67 = scmp.eq.s32.totalorder %s19, 1
    %p68 = por %p66, %p67
    %p70 = scmp.ne.s32.totalorder %s53, %s69
    %p71 = scmp.eq.s32.totalorder %s19, 0
    %p72 = por %p70, %p71
    %s74 = sadd.s32 %s73, 1
    %p77 = scmp.eq.s32.totalorder %s13, 1
    %p78 = scmp.ne.s32.totalorder %s73, %s75
    %p79 = scmp.eq.s32.totalorder %s13, 0
    %p80 = por %p78, %p79
    %p81 = scmp.ne.s32.totalorder %s73, %s75
    %p82 = scmp.eq.s32.totalorder %s18, 1
    %p83 = por %p81, %p82
    %p84 = scmp.ne.s32.totalorder %s75, %s76
    %p85 = scmp.eq.s32.totalorder %s18, 0
    %p86 = por %p84, %p85
    %p87 = scmp.ne.s32.totalorder %s75, %s76
    %p88 = scmp.eq.s32.totalorder %s19, 1
    %p89 = por %p87, %p88
    %p91 = scmp.ne.s32.totalorder %s76, %s90
    %p92 = scmp.eq.s32.totalorder %s19, 0
    %p93 = por %p91, %p92
    %s95 = sadd.s32 %s94, 1
    %p98 = scmp.eq.s32.totalorder %s13, 1
    %p99 = scmp.ne.s32.totalorder %s94, %s96
    %p100 = scmp.eq.s32.totalorder %s13, 0
    %p101 = por %p99, %p100
    %p102 = scmp.ne.s32.totalorder %s94, %s96
    %p103 = scmp.eq.s32.totalorder %s18, 1
    %p104 = por %p102, %p103
    %p105 = scmp.ne.s32.totalorder %s96, %s97
    %p106 = scmp.eq.s32.totalorder %s18, 0
    %p107 = por %p105, %p106
    %p108 = scmp.ne.s32.totalorder %s96, %s97
    %p109 = scmp.eq.s32.totalorder %s19, 1
    %p110 = por %p108, %p109
    %p112 = scmp.ne.s32.totalorder %s97, %s111
    %p113 = scmp.eq.s32.totalorder %s19, 0
    %p114 = por %p112, %p113
    %s116 = sadd.s32 %s115, 1
    %p119 = scmp.eq.s32.totalorder %s13, 1
    %p120 = scmp.ne.s32.totalorder %s115, %s117
    %p121 = scmp.eq.s32.totalorder %s13, 0
    %p122 = por %p120, %p121
    %p123 = scmp.ne.s32.totalorder %s115, %s117
    %p124 = scmp.eq.s32.totalorder %s18, 1
    %p125 = por %p123, %p124
    %p126 = scmp.ne.s32.totalorder %s117, %s118
    %p127 = scmp.eq.s32.totalorder %s18, 0
    %p128 = por %p126, %p127
    %p129 = scmp.ne.s32.totalorder %s117, %s118
    %p130 = scmp.eq.s32.totalorder %s19, 1
    %p131 = por %p129, %p130
    %p133 = scmp.ne.s32.totalorder %s118, %s132
    %p134 = scmp.eq.s32.totalorder %s19, 0
    %p135 = por %p133, %p134
    %s137 = sadd.s32 %s136, 1
    %p140 = scmp.eq.s32.totalorder %s13, 1
    %p141 = scmp.ne.s32.totalorder %s136, %s138
    %p142 = scmp.eq.s32.totalorder %s13, 0
    %p143 = por %p141, %p142
    %p144 = scmp.ne.s32.totalorder %s136, %s138
    %p145 = scmp.eq.s32.totalorder %s18, 1
    %p146 = por %p144, %p145
    %p147 = scmp.ne.s32.totalorder %s138, %s139
    %p148 = scmp.eq.s32.totalorder %s18, 0
    %p149 = por %p147, %p148
    %p150 = scmp.ne.s32.totalorder %s138, %s139
    %p151 = scmp.eq.s32.totalorder %s19, 1
    %p152 = por %p150, %p151
    %p154 = scmp.ne.s32.totalorder %s139, %s153
    %p155 = scmp.eq.s32.totalorder %s19, 0
    %p156 = por %p154, %p155
    %s158 = sadd.s32 %s157, 1
    %p161 = scmp.eq.s32.totalorder %s13, 1
    %p162 = scmp.ne.s32.totalorder %s157, %s159
    %p163 = scmp.eq.s32.totalorder %s13, 0
    %p164 = por %p162, %p163
    %p165 = scmp.ne.s32.totalorder %s157, %s159
    %p166 = scmp.eq.s32.totalorder %s18, 1
    %p167 = por %p165, %p166
    %p168 = scmp.ne.s32.totalorder %s159, %s160
    %p169 = scmp.eq.s32.totalorder %s18, 0
    %p170 = por %p168, %p169
    %p171 = scmp.ne.s32.totalorder %s159, %s160
    %p172 = scmp.eq.s32.totalorder %s19, 1
    %p173 = por %p171, %p172
    %p175 = scmp.ne.s32.totalorder %s160, %s174
    %p176 = scmp.eq.s32.totalorder %s19, 0
    %p177 = por %p175, %p176
    %s179 = sadd.s32 %s178, 1
    %p182 = scmp.eq.s32.totalorder %s13, 1
    %p183 = scmp.ne.s32.totalorder %s178, %s180
    %p184 = scmp.eq.s32.totalorder %s13, 0
    %p185 = por %p183, %p184
    %p186 = scmp.ne.s32.totalorder %s178, %s180
    %p187 = scmp.eq.s32.totalorder %s18, 1
    %p188 = por %p186, %p187
    %p189 = scmp.ne.s32.totalorder %s180, %s181
    %p190 = scmp.eq.s32.totalorder %s18, 0
    %p191 = por %p189, %p190
    %p192 = scmp.ne.s32.totalorder %s180, %s181
    %p193 = scmp.eq.s32.totalorder %s19, 1
    %p194 = por %p192, %p193
    %p196 = scmp.ne.s32.totalorder %s181, %s195
    %p197 = scmp.eq.s32.totalorder %s19, 0
    %p198 = por %p196, %p197
    %p199 = scmp.le.s32.totalorder 1, %s13
    %p200 = scmp.lt.s32.totalorder %s13, 3
    %p201 = pnand %p199, %p200
    %p202 = pneg %p201
    // Predicated region
    $region9: #{mlp_forward.1} parent=5 // pred_check
      _
    $region10: #{mlp_forward.1} parent=5 // pred_check_branch
      %204 = sbr.rel (%p201) target = $region12
    $region11: #{mlp_forward.1} parent=5 // pred_region
      %s205 = ssub.s32 %s13, 1
      // Predicated region
      $region13: #{mlp_forward.1} parent=11 // pred_check
        %p206 = pneg %p86
      $region14: #{mlp_forward.1} parent=11 // pred_check_branch
        %208 = sbr.rel (%p206) target = $region16
      $region15: #{mlp_forward.1} parent=11 // pred_region
        _
      $region16: #{mlp_forward.1} parent=11 // pred_fallthru
        _
      // Predicated region
      $region17: #{mlp_forward.1} parent=11 // pred_check
        %p209 = pneg %p107
      $region18: #{mlp_forward.1} parent=11 // pred_check_branch
        %211 = sbr.rel (%p209) target = $region20
      $region19: #{mlp_forward.1} parent=11 // pred_region
        _
      $region20: #{mlp_forward.1} parent=11 // pred_fallthru
        _
      // Predicated region
      $region21: #{mlp_forward.1} parent=11 // pred_check
        %p212 = pneg %p128
      $region22: #{mlp_forward.1} parent=11 // pred_check_branch
        %214 = sbr.rel (%p212) target = $region24
      $region23: #{mlp_forward.1} parent=11 // pred_region
        _
      $region24: #{mlp_forward.1} parent=11 // pred_fallthru
        _
      // Predicated region
      $region25: #{mlp_forward.1} parent=11 // pred_check
        %p215 = pneg %p149
      $region26: #{mlp_forward.1} parent=11 // pred_check_branch
        %217 = sbr.rel (%p215) target = $region28
      $region27: #{mlp_forward.1} parent=11 // pred_region
        _
      $region28: #{mlp_forward.1} parent=11 // pred_fallthru
        _
      // Predicated region
      $region29: #{mlp_forward.1} parent=11 // pred_check
        %p218 = pneg %p170
      $region30: #{mlp_forward.1} parent=11 // pred_check_branch
        %220 = sbr.rel (%p218) target = $region32
      $region31: #{mlp_forward.1} parent=11 // pred_region
        _
      $region32: #{mlp_forward.1} parent=11 // pred_fallthru
        _
    $region12: #{mlp_forward.1} parent=5 // pred_fallthru
      _
    %p221 = scmp.lt.s32.totalorder %s13, 2
    // Predicated region
    $region33: #{mlp_forward.1} parent=5 // pred_check
      %p222 = pneg %p221
    $region34: #{mlp_forward.1} parent=5 // pred_check_branch
      %224 = sbr.rel (%p222) target = $region36
    $region35: #{mlp_forward.1} parent=5 // pred_region
      // Predicated region
      $region37: #{mlp_forward.1} parent=35 // pred_check
        %p225 = pneg %p33
      $region38: #{mlp_forward.1} parent=35 // pred_check_branch
        %227 = sbr.rel (%p225) target = $region40
      $region39: #{mlp_forward.1} parent=35 // pred_region
        %p228 = scmp.lt.s32.totalorder %s13, 1
        %s229 = scalar_select %p228, %s13, 1
        %s230 = smul.addr %s229, 4
        %s231 = scalar_lea.vmem %s0, %s230
      $region40: #{mlp_forward.1} parent=35 // pred_fallthru
        _
      // Predicated region
      $region41: #{mlp_forward.1} parent=35 // pred_check
        %p232 = pneg %p59
      $region42: #{mlp_forward.1} parent=35 // pred_check_branch
        %234 = sbr.rel (%p232) target = $region44
      $region43: #{mlp_forward.1} parent=35 // pred_region
        %s235 = smul.u32 16, %s13
        %p236 = scmp.lt.s32.totalorder %s235, 31
        %s237 = scalar_select %p236, %s235, 31
        %s238 = smul.addr %s237, 4
        %s239 = scalar_lea.vmem %s1, %s238
        %s240 = smul.u32 16, %s13
      $region44: #{mlp_forward.1} parent=35 // pred_fallthru
        _
    $region36: #{mlp_forward.1} parent=5 // pred_fallthru
      _
    %p241 = scmp.le.s32.totalorder 1, %s13
    %p242 = scmp.lt.s32.totalorder %s13, 3
    %p243 = pnand %p241, %p242
    %p244 = pneg %p243
    // Predicated region
    $region45: #{mlp_forward.1} parent=5 // pred_check
      _
    $region46: #{mlp_forward.1} parent=5 // pred_check_branch
      %246 = sbr.rel (%p243) target = $region48
    $region47: #{mlp_forward.1} parent=5 // pred_region
      %s247 = ssub.s32 %s13, 1
      %p248 = scmp.lt.s32.totalorder %s18, 1
      %s249 = scalar_select %p248, %s18, 1
      %s250 = smul.addr %s249, 4
      %s251 = scalar_lea.vmem %s0, %s250
      %p252 = pneg %p39
      %p253 = pneg %p36
      %s254 = smul.u32 16, %s18
      %p255 = scmp.lt.s32.totalorder %s254, 31
      %s256 = scalar_select %p255, %s254, 31
      %s257 = smul.addr %s256, 4
      %s258 = scalar_lea.vmem %s1, %s257
      %p259 = pneg %p65
      %p260 = pneg %p62
      %p261 = pneg %p86
      %p262 = pneg %p83
      %p263 = pneg %p107
      %p264 = pneg %p104
      %p265 = pneg %p128
      %p266 = pneg %p125
      %p267 = pneg %p149
      %p268 = pneg %p146
      %p269 = pneg %p170
      %p270 = pneg %p167
      %p271 = pneg %p191
      %p272 = pneg %p188
      %p273 = scmp.lt.s32.totalorder %s18, 1
      %s274 = scalar_select %p273, %s18, 1
      %s275 = smul.addr %s274, 4
      %s276 = scalar_lea.vmem %s0, %s275
      %s277 = smul.u32 16, %s18
      %p278 = scmp.lt.s32.totalorder %s277, 31
      %s279 = scalar_select %p278, %s277, 31
      %s280 = smul.addr %s279, 4
      %s281 = scalar_lea.vmem %s1, %s280
      %s282 = smul.u32 16, %s18
      %p284 = scmp.eq.s32.totalorder %s18, 0
      // Predicated region
      $region49: #{mlp_forward.1} parent=47 // pred_check
        %p285 = pneg %p284
      $region50: #{mlp_forward.1} parent=47 // pred_check_branch
        %287 = sbr.rel (%p285) target = $region52
      $region51: #{mlp_forward.1} parent=47 // pred_region
        %288 = vst [vmem:[#allocation2] sm:$0xff] 0.0
      $region52: #{mlp_forward.1} parent=47 // pred_fallthru
        _
      %v289 = vld [vmem:[#allocation2] sm:$0xff]
      %v290 = vld [vmem:[%s276] sm:$0xf]
      %v291 = vld [vmem:[%s281] sm:$0xf]
      %v292 = vld [vmem:[%s281 + $0x4] sm:$0xf]
      %v293 = vld [vmem:[%s281 + $0x8] sm:$0xf]
      %v294 = vld [vmem:[%s281 + $0xc] sm:$0xf]
      %v295 = vld [vmem:[%s281 + $0x10] sm:$0xf]
      %v296 = vld [vmem:[%s281 + $0x14] sm:$0xf]
      %v297 = vld [vmem:[%s281 + $0x18] sm:$0xf]
      %v298 = vld [vmem:[%s281 + $0x1c] sm:$0xf]
      %v299 = vld [vmem:[%s281 + $0x20] sm:$0xf]
      %v300 = vld [vmem:[%s281 + $0x24] sm:$0xf]
      %v301 = vld [vmem:[%s281 + $0x28] sm:$0xf]
      %v302 = vld [vmem:[%s281 + $0x2c] sm:$0xf]
      %v303 = vld [vmem:[%s281 + $0x30] sm:$0xf]
      %v304 = vld [vmem:[%s281 + $0x34] sm:$0xf]
      %v305 = vld [vmem:[%s281 + $0x38] sm:$0xf]
      %v306 = vld [vmem:[%s281 + $0x3c] sm:$0xf]
      %v323 = vunpack.c.l.b16 %v291
      %v324 = vunpack.c.l.b16 %v292
      %v325 = vunpack.c.l.b16 %v293
      %v326 = vunpack.c.l.b16 %v294
      %v327 = vunpack.c.l.b16 %v295
      %v328 = vunpack.c.l.b16 %v296
      %v329 = vunpack.c.l.b16 %v297
      %v330 = vunpack.c.l.b16 %v298
      %v331 = vunpack.c.l.b16 %v299
      %v332 = vunpack.c.l.b16 %v300
      %v333 = vunpack.c.l.b16 %v301
      %v334 = vunpack.c.l.b16 %v302
      %v335 = vunpack.c.l.b16 %v303
      %v336 = vunpack.c.l.b16 %v304
      %v337 = vunpack.c.l.b16 %v305
      %v338 = vunpack.c.l.b16 %v306
      %v339 = vpack.c.b16 %v324, %v323
      %v340 = vpack.c.b16 %v326, %v325
      %v341 = vpack.c.b16 %v328, %v327
      %v342 = vpack.c.b16 %v330, %v329
      %v343 = vpack.c.b16 %v332, %v331
      %v344 = vpack.c.b16 %v334, %v333
      %v345 = vpack.c.b16 %v336, %v335
      %v346 = vpack.c.b16 %v338, %v337
      %355 = vmatprep.subr.bf16.mxu0 0
      %356 = vmatpush1.bf16.msra.mxu0 %v339
      %357 = vmatprep.subr.bf16.mxu0 0
      %358 = vmatpush1.bf16.msra.mxu0 %v340
      %359 = vmatprep.subr.bf16.mxu0 0
      %360 = vmatpush1.bf16.msra.mxu0 %v341
      %361 = vmatprep.subr.bf16.mxu0 0
      %362 = vmatpush1.bf16.msra.mxu0 %v342
      %363 = vmatprep.subr.bf16.mxu0 0
      %364 = vmatpush1.bf16.msra.mxu0 %v343
      %365 = vmatprep.subr.bf16.mxu0 0
      %366 = vmatpush1.bf16.msra.mxu0 %v344
      %367 = vmatprep.subr.bf16.mxu0 0
      %368 = vmatpush1.bf16.msra.mxu0 %v345
      %369 = vmatprep.subr.bf16.mxu0 0
      %370 = vmatpush1.bf16.msra.mxu0 %v346
      %371 = vmatprep.subr.bf16.mxu0 0
      %372 = vmatpush1.bf16.msra.mxu0 0
      %373 = vmatprep.subr.bf16.mxu0 0
      %374 = vmatpush1.bf16.msra.mxu0 0
      %375 = vmatprep.subr.bf16.mxu0 0
      %376 = vmatpush1.bf16.msra.mxu0 0
      %377 = vmatprep.subr.bf16.mxu0 0
      %378 = vmatpush1.bf16.msra.mxu0 0
      %379 = vmatprep.subr.bf16.mxu0 0
      %380 = vmatpush1.bf16.msra.mxu0 0
      %381 = vmatprep.subr.bf16.mxu0 0
      %382 = vmatpush1.bf16.msra.mxu0 0
      %383 = vmatprep.subr.bf16.mxu0 0
      %384 = vmatpush1.bf16.msra.mxu0 0
      %385 = vmatprep.subr.bf16.mxu0 0
      %386 = vmatpush1.bf16.msra.mxu0 0
      %387 = vmatprep.mubr.bf16.mxu0 0
      %388 = vmatmul.mubr.bf16.gmra.mrb[0].mxu0 %v290
      %v389 = vpop.f32.mrb[0].mxu0
      %v390 = vadd.f32 0.0, %v389
      %v391 = vpop.f32.mrb[0].mxu0
      %v392 = vpop.f32.mrb[0].mxu0
      %v393 = vpop.f32.mrb[0].mxu0
      %394 = vdwg.mxu0
      %v395 = vadd.f32 %v289, %v390
      %396 = vst [vmem:[#allocation2] sm:$0xff] %v395
      %p397 = scmp.eq.s32.totalorder %s18, 1
      // Predicated region
      $region53: #{mlp_forward.1} parent=47 // pred_check
        %p398 = pneg %p397
      $region54: #{mlp_forward.1} parent=47 // pred_check_branch
        %400 = sbr.rel (%p398) target = $region56
      $region55: #{mlp_forward.1} parent=47 // pred_region
        %v401 = vld [vmem:[#allocation2] sm:$0xff]
        %v402 = vld [vmem:[%s2] sm:$0x1]
        %v404 = vlaneseq
        %v405 = vshrl.u32 %v404, 7
        %v406 = vsub.s32 0, %v405
        %v407 = vrot.slane %v402, %v406
        %v409 = vadd.f32 %v401, %v407
        %v410 = vmax.f32 %v409, 0.0
        %v411 = vpack.c.bf16 %v410, %v410
        %v412 = vld [vmem:[%s3] sm:$0xf]
        %v413 = vld [vmem:[%s3 + $0x4] sm:$0xf]
        %v414 = vld [vmem:[%s3 + $0x8] sm:$0xf]
        %v415 = vld [vmem:[%s3 + $0xc] sm:$0xf]
        %v416 = vld [vmem:[%s3 + $0x10] sm:$0xf]
        %v417 = vld [vmem:[%s3 + $0x14] sm:$0xf]
        %v418 = vld [vmem:[%s3 + $0x18] sm:$0xf]
        %v419 = vld [vmem:[%s3 + $0x1c] sm:$0xf]
        %v420 = vld [vmem:[%s3 + $0x20] sm:$0xf]
        %v421 = vld [vmem:[%s3 + $0x24] sm:$0xf]
        %v422 = vld [vmem:[%s3 + $0x28] sm:$0xf]
        %v423 = vld [vmem:[%s3 + $0x2c] sm:$0xf]
        %v424 = vld [vmem:[%s3 + $0x30] sm:$0xf]
        %v425 = vld [vmem:[%s3 + $0x34] sm:$0xf]
        %v426 = vld [vmem:[%s3 + $0x38] sm:$0xf]
        %v427 = vld [vmem:[%s3 + $0x3c] sm:$0xf]
        %v428 = vld [vmem:[%s4] sm:$0x1]
        %v430 = vlaneseq
        %v431 = vshrl.u32 %v430, 7
        %v432 = vsub.s32 0, %v431
        %v433 = vrot.slane %v428, %v432
        %v451 = vunpack.c.l.b16 %v412
        %v452 = vunpack.c.l.b16 %v413
        %v453 = vunpack.c.l.b16 %v414
        %v454 = vunpack.c.l.b16 %v415
        %v455 = vunpack.c.l.b16 %v416
        %v456 = vunpack.c.l.b16 %v417
        %v457 = vunpack.c.l.b16 %v418
        %v458 = vunpack.c.l.b16 %v419
        %v459 = vunpack.c.l.b16 %v420
        %v460 = vunpack.c.l.b16 %v421
        %v461 = vunpack.c.l.b16 %v422
        %v462 = vunpack.c.l.b16 %v423
        %v463 = vunpack.c.l.b16 %v424
        %v464 = vunpack.c.l.b16 %v425
        %v465 = vunpack.c.l.b16 %v426
        %v466 = vunpack.c.l.b16 %v427
        %v467 = vpack.c.b16 %v452, %v451
        %v468 = vpack.c.b16 %v454, %v453
        %v469 = vpack.c.b16 %v456, %v455
        %v470 = vpack.c.b16 %v458, %v457
        %v471 = vpack.c.b16 %v460, %v459
        %v472 = vpack.c.b16 %v462, %v461
        %v473 = vpack.c.b16 %v464, %v463
        %v474 = vpack.c.b16 %v466, %v465
        %483 = vmatprep.subr.bf16.mxu0 0
        %484 = vmatpush1.bf16.msra.mxu0 %v467
        %485 = vmatprep.subr.bf16.mxu0 0
        %486 = vmatpush1.bf16.msra.mxu0 %v468
        %487 = vmatprep.subr.bf16.mxu0 0
        %488 = vmatpush1.bf16.msra.mxu0 %v469
        %489 = vmatprep.subr.bf16.mxu0 0
        %490 = vmatpush1.bf16.msra.mxu0 %v470
        %491 = vmatprep.subr.bf16.mxu0 0
        %492 = vmatpush1.bf16.msra.mxu0 %v471
        %493 = vmatprep.subr.bf16.mxu0 0
        %494 = vmatpush1.bf16.msra.mxu0 %v472
        %495 = vmatprep.subr.bf16.mxu0 0
        %496 = vmatpush1.bf16.msra.mxu0 %v473
        %497 = vmatprep.subr.bf16.mxu0 0
        %498 = vmatpush1.bf16.msra.mxu0 %v474
        %499 = vmatprep.subr.bf16.mxu0 0
        %500 = vmatpush1.bf16.msra.mxu0 0
        %501 = vmatprep.subr.bf16.mxu0 0
        %502 = vmatpush1.bf16.msra.mxu0 0
        %503 = vmatprep.subr.bf16.mxu0 0
        %504 = vmatpush1.bf16.msra.mxu0 0
        %505 = vmatprep.subr.bf16.mxu0 0
        %506 = vmatpush1.bf16.msra.mxu0 0
        %507 = vmatprep.subr.bf16.mxu0 0
        %508 = vmatpush1.bf16.msra.mxu0 0
        %509 = vmatprep.subr.bf16.mxu0 0
        %510 = vmatpush1.bf16.msra.mxu0 0
        %511 = vmatprep.subr.bf16.mxu0 0
        %512 = vmatpush1.bf16.msra.mxu0 0
        %513 = vmatprep.subr.bf16.mxu0 0
        %514 = vmatpush1.bf16.msra.mxu0 0
        %515 = vmatprep.mubr.bf16.mxu0 0
        %516 = vmatmul.mubr.bf16.gmra.mrb[0].mxu0 %v411
        %v517 = vpop.f32.mrb[0].mxu0
        %v518 = vadd.f32 %v433, %v517
        %v519 = vpop.f32.mrb[0].mxu0
        %v520 = vpop.f32.mrb[0].mxu0
        %v521 = vpop.f32.mrb[0].mxu0
        %522 = vdwg.mxu0
        %v523 = vmax.f32 %v518, 0.0
        %v524 = vpack.c.bf16 %v523, %v523
        %v525 = vld [vmem:[%s5] sm:$0xf]
        %v526 = vld [vmem:[%s5 + $0x4] sm:$0xf]
        %v527 = vld [vmem:[%s5 + $0x8] sm:$0xf]
        %v528 = vld [vmem:[%s5 + $0xc] sm:$0xf]
        %v529 = vld [vmem:[%s5 + $0x10] sm:$0xf]
        %v530 = vld [vmem:[%s5 + $0x14] sm:$0xf]
        %v531 = vld [vmem:[%s5 + $0x18] sm:$0xf]
        %v532 = vld [vmem:[%s5 + $0x1c] sm:$0xf]
        %v533 = vld [vmem:[%s5 + $0x20] sm:$0xf]
        %v534 = vld [vmem:[%s5 + $0x24] sm:$0xf]
        %v535 = vld [vmem:[%s5 + $0x28] sm:$0xf]
        %v536 = vld [vmem:[%s5 + $0x2c] sm:$0xf]
        %v537 = vld [vmem:[%s5 + $0x30] sm:$0xf]
        %v538 = vld [vmem:[%s5 + $0x34] sm:$0xf]
        %v539 = vld [vmem:[%s5 + $0x38] sm:$0xf]
        %v540 = vld [vmem:[%s5 + $0x3c] sm:$0xf]
        %v541 = vld [vmem:[%s6] sm:$0x1]
        %v543 = vlaneseq
        %v544 = vshrl.u32 %v543, 7
        %v545 = vsub.s32 0, %v544
        %v546 = vrot.slane %v541, %v545
        %v564 = vunpack.c.l.b16 %v525
        %v565 = vunpack.c.l.b16 %v526
        %v566 = vunpack.c.l.b16 %v527
        %v567 = vunpack.c.l.b16 %v528
        %v568 = vunpack.c.l.b16 %v529
        %v569 = vunpack.c.l.b16 %v530
        %v570 = vunpack.c.l.b16 %v531
        %v571 = vunpack.c.l.b16 %v532
        %v572 = vunpack.c.l.b16 %v533
        %v573 = vunpack.c.l.b16 %v534
        %v574 = vunpack.c.l.b16 %v535
        %v575 = vunpack.c.l.b16 %v536
        %v576 = vunpack.c.l.b16 %v537
        %v577 = vunpack.c.l.b16 %v538
        %v578 = vunpack.c.l.b16 %v539
        %v579 = vunpack.c.l.b16 %v540
        %v580 = vpack.c.b16 %v565, %v564
        %v581 = vpack.c.b16 %v567, %v566
        %v582 = vpack.c.b16 %v569, %v568
        %v583 = vpack.c.b16 %v571, %v570
        %v584 = vpack.c.b16 %v573, %v572
        %v585 = vpack.c.b16 %v575, %v574
        %v586 = vpack.c.b16 %v577, %v576
        %v587 = vpack.c.b16 %v579, %v578
        %596 = vmatprep.subr.bf16.mxu0 0
        %597 = vmatpush1.bf16.msra.mxu0 %v580
        %598 = vmatprep.subr.bf16.mxu0 0
        %599 = vmatpush1.bf16.msra.mxu0 %v581
        %600 = vmatprep.subr.bf16.mxu0 0
        %601 = vmatpush1.bf16.msra.mxu0 %v582
        %602 = vmatprep.subr.bf16.mxu0 0
        %603 = vmatpush1.bf16.msra.mxu0 %v583
        %604 = vmatprep.subr.bf16.mxu0 0
        %605 = vmatpush1.bf16.msra.mxu0 %v584
        %606 = vmatprep.subr.bf16.mxu0 0
        %607 = vmatpush1.bf16.msra.mxu0 %v585
        %608 = vmatprep.subr.bf16.mxu0 0
        %609 = vmatpush1.bf16.msra.mxu0 %v586
        %610 = vmatprep.subr.bf16.mxu0 0
        %611 = vmatpush1.bf16.msra.mxu0 %v587
        %612 = vmatprep.subr.bf16.mxu0 0
        %613 = vmatpush1.bf16.msra.mxu0 0
        %614 = vmatprep.subr.bf16.mxu0 0
        %615 = vmatpush1.bf16.msra.mxu0 0
        %616 = vmatprep.subr.bf16.mxu0 0
        %617 = vmatpush1.bf16.msra.mxu0 0
        %618 = vmatprep.subr.bf16.mxu0 0
        %619 = vmatpush1.bf16.msra.mxu0 0
        %620 = vmatprep.subr.bf16.mxu0 0
        %621 = vmatpush1.bf16.msra.mxu0 0
        %622 = vmatprep.subr.bf16.mxu0 0
        %623 = vmatpush1.bf16.msra.mxu0 0
        %624 = vmatprep.subr.bf16.mxu0 0
        %625 = vmatpush1.bf16.msra.mxu0 0
        %626 = vmatprep.subr.bf16.mxu0 0
        %627 = vmatpush1.bf16.msra.mxu0 0
        %628 = vmatprep.mubr.bf16.mxu0 0
        %629 = vmatmul.mubr.bf16.gmra.mrb[0].mxu0 %v524
        %v630 = vpop.f32.mrb[0].mxu0
        %v631 = vadd.f32 %v546, %v630
        %v632 = vpop.f32.mrb[0].mxu0
        %v633 = vpop.f32.mrb[0].mxu0
        %v634 = vpop.f32.mrb[0].mxu0
        %635 = vdwg.mxu0
        %636 = vst [vmem:[%s7] sm:$0xff] %v631
      $region56: #{mlp_forward.1} parent=47 // pred_fallthru
        _
      // Predicated region
      $region57: #{mlp_forward.1} parent=47 // pred_check
        %p637 = pneg %p188
      $region58: #{mlp_forward.1} parent=47 // pred_check_branch
        %639 = sbr.rel (%p637) target = $region60
      $region59: #{mlp_forward.1} parent=47 // pred_region
        _
      $region60: #{mlp_forward.1} parent=47 // pred_fallthru
        _
      // Predicated region
      $region61: #{mlp_forward.1} parent=47 // pred_check
        %p640 = pneg %p188
      $region62: #{mlp_forward.1} parent=47 // pred_check_branch
        %642 = sbr.rel (%p640) target = $region64
      $region63: #{mlp_forward.1} parent=47 // pred_region
        _
      $region64: #{mlp_forward.1} parent=47 // pred_fallthru
        _
    $region48: #{mlp_forward.1} parent=5 // pred_fallthru
      _
    %p643 = scmp.le.s32.totalorder 2, %s13
    // Predicated region
    $region65: #{mlp_forward.1} parent=5 // pred_check
      %p644 = pneg %p643
    $region66: #{mlp_forward.1} parent=5 // pred_check_branch
      %646 = sbr.rel (%p644) target = $region68
    $region67: #{mlp_forward.1} parent=5 // pred_region
      %s647 = ssub.s32 %s13, 2
    $region68: #{mlp_forward.1} parent=5 // pred_fallthru
      _
  $region6: #{mlp_forward.1} parent=0 // loop_footer
    %s17 = sadd.s32 1, %s13
  $region7: #{mlp_forward.1} parent=0 // loop_footer_branch
    %12 = sbr.rel target = $region3
  $region8: #{mlp_forward.1} parent=0 // loop_exit
    _

</llo_original>
